<compile_context>
chip_gen: v5e
topology: v5e:2x2
jax: 0.10.0
libtpu: 0.0.40
codegen_flags: <defaults>
</compile_context>

<pallas_src>
import functools

import jax
import jax.numpy as jnp
from jax.experimental import pallas as pl
from jax.experimental.pallas import tpu as pltpu


_NEG_BIG = -1e30  # large finite negative: masked lanes underflow to exp()==0,
                  # and fully-masked rows give uniform alphas instead of NaN.


def _bahdanau_kernel(q_ref, pk_ref, v_ref, len_ref, wq_ref, we_ref,
                     ctx_ref, alpha_ref, *, elem_dtype):
    # Block shapes (leading grid dim of size 1 indexed away with [0]):
    #   q_ref   (1, BT, Q)     pk_ref (1, BT, S, H)   v_ref (1, BT, S, V)
    #   len_ref (1, BT, 1)     wq_ref (Q, H)          we_ref (1, H)
    #   ctx_ref (1, BT, V)     alpha_ref (1, BT, S)
    BT, S, _H = pk_ref.shape[1], pk_ref.shape[2], pk_ref.shape[3]

    # Query projection: stream-dtype (bf16) operands straight into the MXU,
    # f32 accumulation.  One batched matmul for the whole (BT, Q) slab.
    qp = jnp.dot(q_ref[0], wq_ref[...],
                 preferred_element_type=jnp.float32)               # (BT, H) f32

    # Bahdanau energies: add/tanh/mul in `elem_dtype` (bf16 on v6e/v7x, f32 on
    # v5e and older — no bf16 VPU/EUP there); H-reduction accumulates in f32.
    pk = pk_ref[0].astype(elem_dtype)                              # (BT, S, H)
    t = jnp.tanh(qp.astype(elem_dtype)[:, None, :] + pk)           # (BT, S, H)
    s = jnp.sum(t * we_ref[...].astype(elem_dtype), axis=-1,
                dtype=jnp.float32)                                 # (BT, S) f32

    # In-kernel prefix mask from per-row lengths (replaces a [B,1,S] mask DMA).
    pos = jax.lax.broadcasted_iota(jnp.int32, (BT, S), 1)
    s = jnp.where(pos < len_ref[0], s, _NEG_BIG)                   # (BT, S)

    # Softmax along the lane axis (S), all f32; EUP approx-reciprocal for the
    # normalization instead of a VPU divide sequence.
    m = jnp.max(s, axis=-1, keepdims=True)                         # (BT, 1)
    e = jnp.exp(s - m)
    alphas = e * pl.reciprocal(jnp.sum(e, axis=-1, keepdims=True),
                               approx=True)                        # (BT, S) f32

    # Context: VPU broadcast-multiply + sublane/XLU reduce over S with f32
    # accumulation (M=1 batched MXU dots would run at <1/256 utilization).
    v = v_ref[0]                                                   # (BT, S, V)
    ctx = jnp.sum(alphas[:, :, None].astype(v.dtype) * v, axis=1,
                  dtype=jnp.float32)                               # (BT, V) f32

    ctx_ref[0] = ctx.astype(ctx_ref.dtype)                         # lane-dense
    alpha_ref[0] = alphas.astype(alpha_ref.dtype)                  # lane-dense


def _hw_flags():
    """Best-effort hardware introspection; safe conservative defaults."""
    kind = ""
    try:
        kind = jax.devices()[0].device_kind.lower()
    except Exception:
        pass
    # bf16 VPU/EUP elementwise path only on v6e / v7x-class parts.
    bf16_elem = ("v6" in kind) or ("v7" in kind) or ("tpu7" in kind)
    # Two TensorCores per chip only on v7x-class parts.
    two_tc = ("v7" in kind) or ("tpu7" in kind)
    physical_vmem = (64 << 20) if two_tc else (128 << 20)
    try:
        info = pltpu.get_tpu_info()
        physical_vmem = int(getattr(info, "vmem_capacity_bytes", physical_vmem))
    except Exception:
        pass
    return bf16_elem, two_tc, physical_vmem


def _choose_blocking(B, S, H, V, Q, stream_itemsize, elem_itemsize,
                     two_tc, vmem_budget_bytes):
    """Rows-per-step (BT) and grid length.

    Targets ~3 MiB of streamed pk+value bytes per step (85%+ of HBM roofline
    in measured BlockSpec pipelining data), forces a 2-way split only on 2-TC
    chips when both halves stay >= ~1 MiB, and caps BT with an explicit
    per-row VMEM occupancy model so the kernel stays inside the budget."""
    stream_row = S * (H + V) * stream_itemsize        # pk + value HBM bytes/row
    # Per-row VMEM occupancy: double-buffered streamed blocks + in-kernel
    # temporaries (add/tanh slabs in elem dtype, context product in stream
    # dtype, a few f32 (S,)/(V,) rows) + double-buffered outputs.
    vmem_row = (2 * stream_row
                + 2 * Q * stream_itemsize
                + 2 * S * H * elem_itemsize
                + 2 * S * V * stream_itemsize
                + 8 * S * 4
                + 2 * (S + V) * 4)

    target = 3 << 20                                  # ~3 MiB streamed / step
    n_steps = max(1, pl.cdiv(B * stream_row, target))
    if two_tc and B >= 2 and B * stream_row >= 2 * (1 << 20):
        n_steps = max(n_steps, 2)                     # keep both v7x TCs busy
    n_steps = min(n_steps, B)

    bt = pl.cdiv(B, n_steps)
    bt_cap = max(1, vmem_budget_bytes // max(1, vmem_row))
    bt = max(1, min(bt, bt_cap))
    n_steps = pl.cdiv(B, bt)
    return bt, n_steps


def bahdanau_attention(query, proj_key, value, lengths, wq_t, we_row,
                       *, stream_dtype=jnp.bfloat16, alphas_dtype=None):
    """query [B,1,Q], proj_key [B,S,H], value [B,S,V], lengths [B] int32
    (prefix mask: mask[b, s] = s < lengths[b], as in the source NMT model),
    wq_t [Q,H] (= query_layer.weight.T), we_row [1,H] (= energy_layer.weight).
    Returns (context [B,1,V] in query.dtype, alphas [B,1,S] in alphas_dtype,
    default = stream dtype)."""
    B, _, Q = query.shape
    _, S, H = proj_key.shape
    V = value.shape[-1]

    stream_dtype = jnp.dtype(stream_dtype)
    bf16_elem, two_tc, physical_vmem = _hw_flags()
    elem_dtype = (jnp.bfloat16
                  if (bf16_elem and stream_dtype == jnp.dtype(jnp.bfloat16))
                  else jnp.float32)
    if alphas_dtype is None:
        alphas_dtype = stream_dtype

    vmem_budget = (40 << 20) if physical_vmem <= (64 << 20) else (80 << 20)
    vmem_limit = int(max(32 << 20,
                         min(physical_vmem - (8 << 20),
                             vmem_budget + (16 << 20))))

    bt, n_steps = _choose_blocking(
        B, S, H, V, Q,
        stream_dtype.itemsize, jnp.dtype(elem_dtype).itemsize,
        two_tc, vmem_budget)
    Bp = bt * n_steps
    out_dtype = query.dtype

    # Pre-cast the streamed tensors (and both MXU-dot operands) to the stream
    # dtype in the wrapper; the kernel keeps softmax / accumulation in f32.
    q2 = query.reshape(B, Q).astype(stream_dtype)
    pk = proj_key.astype(stream_dtype)
    val = value.astype(stream_dtype)
    wq = wq_t.astype(stream_dtype)
    we = we_row.astype(elem_dtype)
    lens = lengths.reshape(B).astype(jnp.int32)

    if Bp != B:                       # pad batch to a whole number of blocks
        pad = Bp - B
        q2 = jnp.pad(q2, ((0, pad), (0, 0)))
        pk = jnp.pad(pk, ((0, pad), (0, 0), (0, 0)))
        val = jnp.pad(val, ((0, pad), (0, 0), (0, 0)))
        lens = jnp.pad(lens, (0, pad), constant_values=S)

    # Free, contiguous reshapes: grid dim leads, blocks take full trailing dims
    # so the (8, 128) block constraint is trivially satisfied for any BT.
    qb = q2.reshape(n_steps, bt, Q)
    pkb = pk.reshape(n_steps, bt, S, H)
    vb = val.reshape(n_steps, bt, S, V)
    lenb = lens.reshape(n_steps, bt, 1)

    kernel = functools.partial(_bahdanau_kernel, elem_dtype=elem_dtype)

    ctx_b, alpha_b = pl.pallas_call(
        kernel,
        out_shape=(jax.ShapeDtypeStruct((n_steps, bt, V), out_dtype),
                   jax.ShapeDtypeStruct((n_steps, bt, S), alphas_dtype)),
        grid_spec=pltpu.PrefetchScalarGridSpec(
            num_scalar_prefetch=0,
            grid=(n_steps,),
            in_specs=[
                pl.BlockSpec((1, bt, Q), lambda g: (g, 0, 0)),        # query
                pl.BlockSpec((1, bt, S, H), lambda g: (g, 0, 0, 0)),  # proj_key
                pl.BlockSpec((1, bt, S, V), lambda g: (g, 0, 0, 0)),  # value
                pl.BlockSpec((1, bt, 1), lambda g: (g, 0, 0)),        # lengths
                pl.BlockSpec((Q, H), lambda g: (0, 0)),               # Wq^T
                pl.BlockSpec((1, H), lambda g: (0, 0)),               # We row
            ],
            out_specs=(
                pl.BlockSpec((1, bt, V), lambda g: (g, 0, 0)),        # context
                pl.BlockSpec((1, bt, S), lambda g: (g, 0, 0)),        # alphas
            ),
        ),
        compiler_params=pltpu.CompilerParams(
            dimension_semantics=("parallel",),
            vmem_limit_bytes=vmem_limit),
    )(qb, pkb, vb, lenb, wq, we)

    ctx = ctx_b.reshape(Bp, V)[:B][:, None, :]        # [B, 1, V]
    alphas = alpha_b.reshape(Bp, S)[:B][:, None, :]   # [B, 1, S]
    return ctx, alphas


if __name__ == "__main__":
    B, S = 2, 8
    hidden = 32
    key_size = 2 * hidden          # 64
    query_size = hidden            # 32
    value_dim = key_size           # 64 (values = encoder bi-RNN states)

    key = jax.random.PRNGKey(0)
    k1, k2, k3, k4, k5, k6 = jax.random.split(key, 6)

    # Deterministic parameter init (PyTorch Linear default-style uniform).
    bound_q = 1.0 / (query_size ** 0.5)
    wq_pt = jax.random.uniform(k1, (hidden, query_size), jnp.float32,
                               -bound_q, bound_q)                    # [out, in]
    bound_e = 1.0 / (hidden ** 0.5)
    we_pt = jax.random.uniform(k2, (1, hidden), jnp.float32,
                               -bound_e, bound_e)                    # [1, H]
    # key_layer weight exists in the attention module but proj_key is assumed
    # precomputed (as in Decoder.forward); created only for shape fidelity.
    bound_k = 1.0 / (key_size ** 0.5)
    _wk_pt = jax.random.uniform(k3, (hidden, key_size), jnp.float32,
                                -bound_k, bound_k)

    query = jax.random.normal(k4, (B, 1, query_size), jnp.float32)
    value = jax.random.normal(k5, (B, S, value_dim), jnp.float32)
    proj_key = jax.random.normal(k6, (B, S, hidden), jnp.float32)

    lengths = jnp.array([S, 5], dtype=jnp.int32)

    ctx, alphas = bahdanau_attention(query, proj_key, value, lengths,
                                     jnp.transpose(wq_pt), we_pt)
    jax.block_until_ready((ctx, alphas))

    # Pure-JAX f32 reference (PyTorch semantics).  The kernel streams bf16 and
    # emits bf16 alphas, so tolerances are widened accordingly.
    mask = (jnp.arange(S)[None, None, :] < lengths[:, None, None])   # [B,1,S]
    q_p = jnp.einsum('bik,hk->bih', query, wq_pt)                    # [B,1,H]
    sc = jnp.einsum('bsh,oh->bso', jnp.tanh(q_p + proj_key), we_pt)  # [B,S,1]
    sc = jnp.transpose(sc, (0, 2, 1))                                # [B,1,S]
    sc = jnp.where(mask, sc, -jnp.inf)
    a_ref = jax.nn.softmax(sc, axis=-1)
    c_ref = jnp.einsum('bis,bsv->biv', a_ref, value)
    assert jnp.allclose(alphas.astype(jnp.float32), a_ref,
                        atol=6e-2, rtol=6e-2), "alphas mismatch"
    assert jnp.allclose(ctx.astype(jnp.float32), c_ref,
                        atol=8e-2, rtol=8e-2), "context mismatch"

    print("KERNEL_OK")
</pallas_src>

<mosaic_0001>
module attributes {stable_mosaic.version = 11 : i64} {
  func.func @_bahdanau_kernel(%arg0: i32, %arg1: memref<1x2x32xbf16, #tpu.memory_space<vmem>>, %arg2: memref<1x2x8x32xbf16, #tpu.memory_space<vmem>>, %arg3: memref<1x2x8x64xbf16, #tpu.memory_space<vmem>>, %arg4: memref<1x2x1xi32, #tpu.memory_space<vmem>>, %arg5: memref<32x32xbf16, #tpu.memory_space<vmem>>, %arg6: memref<1x32xf32, #tpu.memory_space<vmem>>, %arg7: memref<1x2x64xf32, #tpu.memory_space<vmem>>, %arg8: memref<1x2x8xbf16, #tpu.memory_space<vmem>>) attributes {dimension_semantics = [#tpu.dimension_semantics<parallel>], iteration_bounds = array<i64: 1>, scalar_prefetch = 0 : i64, scratch_operands = 0 : i64, tpu.core_type = #tpu.core_type<tc>, window_params = [{transform_indices = @transform_0, window_bounds = array<i64: 1, 2, 32>}, {transform_indices = @transform_1, window_bounds = array<i64: 1, 2, 8, 32>}, {transform_indices = @transform_2, window_bounds = array<i64: 1, 2, 8, 64>}, {transform_indices = @transform_3, window_bounds = array<i64: 1, 2, 1>}, {pipeline_mode = #tpu.pipeline_mode<synchronous>, transform_indices = @transform_4, window_bounds = array<i64: 32, 32>}, {pipeline_mode = #tpu.pipeline_mode<synchronous>, transform_indices = @transform_5, window_bounds = array<i64: 1, 32>}, {transform_indices = @transform_6, window_bounds = array<i64: 1, 2, 64>}, {transform_indices = @transform_7, window_bounds = array<i64: 1, 2, 8>}]} {
    %c0 = arith.constant 0 : index
    %c0_0 = arith.constant 0 : index
    %c0_1 = arith.constant 0 : index
    %0 = vector.load %arg1[%c0, %c0_0, %c0_1] : memref<1x2x32xbf16, #tpu.memory_space<vmem>>, vector<1x2x32xbf16>
    %1 = vector.shape_cast %0 : vector<1x2x32xbf16> to vector<2x32xbf16>
    %c0_2 = arith.constant 0 : index
    %c0_3 = arith.constant 0 : index
    %2 = vector.load %arg5[%c0_2, %c0_3] : memref<32x32xbf16, #tpu.memory_space<vmem>>, vector<32x32xbf16>
    %cst = arith.constant dense<0.000000e+00> : vector<2x32xf32>
    %3 = tpu.matmul %1, %2, %cst {dimension_numbers = #tpu.dot_dimension_numbers<[1], [0], [0], [1], [0, 0, 1, 1], [], []>} : vector<2x32xbf16>, vector<32x32xbf16>, vector<2x32xf32> -> vector<2x32xf32>
    %c0_4 = arith.constant 0 : index
    %c0_5 = arith.constant 0 : index
    %c0_6 = arith.constant 0 : index
    %c0_7 = arith.constant 0 : index
    %4 = vector.load %arg2[%c0_4, %c0_5, %c0_6, %c0_7] : memref<1x2x8x32xbf16, #tpu.memory_space<vmem>>, vector<1x2x8x32xbf16>
    %5 = vector.shape_cast %4 : vector<1x2x8x32xbf16> to vector<2x8x32xbf16>
    %6 = arith.extf %5 : vector<2x8x32xbf16> to vector<2x8x32xf32>
    %7 = vector.shape_cast %3 : vector<2x32xf32> to vector<2x1x32xf32>
    %8 = vector.broadcast %7 : vector<2x1x32xf32> to vector<2x8x32xf32>
    %9 = arith.addf %8, %6 : vector<2x8x32xf32>
    %10 = math.tanh %9 : vector<2x8x32xf32>
    %c0_8 = arith.constant 0 : index
    %c0_9 = arith.constant 0 : index
    %11 = vector.load %arg6[%c0_8, %c0_9] : memref<1x32xf32, #tpu.memory_space<vmem>>, vector<1x32xf32>
    %12 = vector.shape_cast %11 : vector<1x32xf32> to vector<1x1x32xf32>
    %13 = vector.broadcast %12 : vector<1x1x32xf32> to vector<2x8x32xf32>
    %14 = arith.mulf %10, %13 : vector<2x8x32xf32>
    %cst_10 = arith.constant dense<0.000000e+00> : vector<2x8xf32>
    %15 = vector.multi_reduction <add>, %14, %cst_10 [2] : vector<2x8x32xf32> to vector<2x8xf32>
    %16 = tpu.iota {dimensions = array<i32: 1>} : vector<2x8xi32>
    %c0_11 = arith.constant 0 : index
    %c0_12 = arith.constant 0 : index
    %c0_13 = arith.constant 0 : index
    %17 = vector.load %arg4[%c0_11, %c0_12, %c0_13] : memref<1x2x1xi32, #tpu.memory_space<vmem>>, vector<1x2x1xi32>
    %18 = vector.shape_cast %17 : vector<1x2x1xi32> to vector<2x1xi32>
    %19 = vector.broadcast %18 : vector<2x1xi32> to vector<2x8xi32>
    %20 = arith.cmpi slt, %16, %19 : vector<2x8xi32>
    %cst_14 = arith.constant -1.000000e+30 : f32
    %21 = vector.broadcast %cst_14 : f32 to vector<2x8xf32>
    %22 = arith.select %20, %15, %21 : vector<2x8xi1>, vector<2x8xf32>
    %cst_15 = arith.constant dense<0xFF800000> : vector<2xf32>
    %23 = vector.multi_reduction <maximumf>, %22, %cst_15 [1] : vector<2x8xf32> to vector<2xf32>
    %24 = vector.shape_cast %23 : vector<2xf32> to vector<2x1xf32>
    %25 = vector.broadcast %24 : vector<2x1xf32> to vector<2x8xf32>
    %26 = arith.subf %22, %25 : vector<2x8xf32>
    %27 = math.exp %26 : vector<2x8xf32>
    %cst_16 = arith.constant dense<0.000000e+00> : vector<2xf32>
    %28 = vector.multi_reduction <add>, %27, %cst_16 [1] : vector<2x8xf32> to vector<2xf32>
    %29 = vector.shape_cast %28 : vector<2xf32> to vector<2x1xf32>
    %30 = tpu.reciprocal %29 {approx = true} : vector<2x1xf32> -> vector<2x1xf32>
    %31 = vector.broadcast %30 : vector<2x1xf32> to vector<2x8xf32>
    %32 = arith.mulf %27, %31 : vector<2x8xf32>
    %c0_17 = arith.constant 0 : index
    %c0_18 = arith.constant 0 : index
    %c0_19 = arith.constant 0 : index
    %c0_20 = arith.constant 0 : index
    %33 = vector.load %arg3[%c0_17, %c0_18, %c0_19, %c0_20] : memref<1x2x8x64xbf16, #tpu.memory_space<vmem>>, vector<1x2x8x64xbf16>
    %34 = vector.shape_cast %33 : vector<1x2x8x64xbf16> to vector<2x8x64xbf16>
    %35 = vector.shape_cast %32 : vector<2x8xf32> to vector<2x8x1xf32>
    %36 = arith.truncf %35 : vector<2x8x1xf32> to vector<2x8x1xbf16>
    %37 = vector.broadcast %36 : vector<2x8x1xbf16> to vector<2x8x64xbf16>
    %38 = arith.mulf %37, %34 : vector<2x8x64xbf16>
    %39 = arith.extf %38 : vector<2x8x64xbf16> to vector<2x8x64xf32>
    %cst_21 = arith.constant dense<0.000000e+00> : vector<2x64xf32>
    %40 = vector.multi_reduction <add>, %39, %cst_21 [1] : vector<2x8x64xf32> to vector<2x64xf32>
    %c0_22 = arith.constant 0 : index
    %c0_23 = arith.constant 0 : index
    %c0_24 = arith.constant 0 : index
    %41 = vector.load %arg7[%c0_22, %c0_23, %c0_24] : memref<1x2x64xf32, #tpu.memory_space<vmem>>, vector<1x2x64xf32>
    %42 = vector.shape_cast %41 : vector<1x2x64xf32> to vector<2x64xf32>
    %43 = vector.shape_cast %40 : vector<2x64xf32> to vector<1x2x64xf32>
    tpu.vector_store %arg7[%c0_22, %c0_23, %c0_24], %43 {strides = array<i32>} : memref<1x2x64xf32, #tpu.memory_space<vmem>>, vector<1x2x64xf32>,
    %44 = arith.truncf %32 : vector<2x8xf32> to vector<2x8xbf16>
    %c0_25 = arith.constant 0 : index
    %c0_26 = arith.constant 0 : index
    %c0_27 = arith.constant 0 : index
    %45 = vector.load %arg8[%c0_25, %c0_26, %c0_27] : memref<1x2x8xbf16, #tpu.memory_space<vmem>>, vector<1x2x8xbf16>
    %46 = vector.shape_cast %45 : vector<1x2x8xbf16> to vector<2x8xbf16>
    %47 = vector.shape_cast %44 : vector<2x8xbf16> to vector<1x2x8xbf16>
    tpu.vector_store %arg8[%c0_25, %c0_26, %c0_27], %47 {strides = array<i32>} : memref<1x2x8xbf16, #tpu.memory_space<vmem>>, vector<1x2x8xbf16>,
    return
  }
  func.func @transform_0(%arg0: i32) -> (i32, i32, i32) {
    %c0_i32 = arith.constant 0 : i32
    %c0_i32_0 = arith.constant 0 : i32
    %c0_i32_1 = arith.constant 0 : i32
    return %arg0, %c0_i32, %c0_i32_0 : i32, i32, i32
  }
  func.func @transform_1(%arg0: i32) -> (i32, i32, i32, i32) {
    %c0_i32 = arith.constant 0 : i32
    %c0_i32_0 = arith.constant 0 : i32
    %c0_i32_1 = arith.constant 0 : i32
    %c0_i32_2 = arith.constant 0 : i32
    return %arg0, %c0_i32, %c0_i32_0, %c0_i32_1 : i32, i32, i32, i32
  }
  func.func @transform_2(%arg0: i32) -> (i32, i32, i32, i32) {
    %c0_i32 = arith.constant 0 : i32
    %c0_i32_0 = arith.constant 0 : i32
    %c0_i32_1 = arith.constant 0 : i32
    %c0_i32_2 = arith.constant 0 : i32
    return %arg0, %c0_i32, %c0_i32_0, %c0_i32_1 : i32, i32, i32, i32
  }
  func.func @transform_3(%arg0: i32) -> (i32, i32, i32) {
    %c0_i32 = arith.constant 0 : i32
    %c0_i32_0 = arith.constant 0 : i32
    %c0_i32_1 = arith.constant 0 : i32
    return %arg0, %c0_i32, %c0_i32_0 : i32, i32, i32
  }
  func.func @transform_4(%arg0: i32) -> (i32, i32) {
    %c0_i32 = arith.constant 0 : i32
    %c0_i32_0 = arith.constant 0 : i32
    %c0_i32_1 = arith.constant 0 : i32
    return %c0_i32, %c0_i32_0 : i32, i32
  }
  func.func @transform_5(%arg0: i32) -> (i32, i32) {
    %c0_i32 = arith.constant 0 : i32
    %c0_i32_0 = arith.constant 0 : i32
    %c0_i32_1 = arith.constant 0 : i32
    return %c0_i32, %c0_i32_0 : i32, i32
  }
  func.func @transform_6(%arg0: i32) -> (i32, i32, i32) {
    %c0_i32 = arith.constant 0 : i32
    %c0_i32_0 = arith.constant 0 : i32
    %c0_i32_1 = arith.constant 0 : i32
    return %arg0, %c0_i32, %c0_i32_0 : i32, i32, i32
  }
  func.func @transform_7(%arg0: i32) -> (i32, i32, i32) {
    %c0_i32 = arith.constant 0 : i32
    %c0_i32_0 = arith.constant 0 : i32
    %c0_i32_1 = arith.constant 0 : i32
    return %arg0, %c0_i32, %c0_i32_0 : i32, i32, i32
  }
}

</mosaic_0001>

<llo_original>
// kernel: tpu_custom_call.1
$region0: #{tpu_custom_call.1}
  #allocation0 [shape = 'u32[]', space=smem, size = 0x4, offset = 0x4, fixed_abs, tag = 'smem constant byte address 0x4 - core index']
  #allocation1 [shape = 'u32[72,128]{1,0:T(1,128)}', space=vmem, size = 0x9000, scoped, tag = 'internal scratch']
  %s0 = inlined_call_operand.vmem [shape: bf16[1,2,32], index: 0, kind: input, shape index: {}]
  %s1 = inlined_call_operand.hbm [shape: bf16[1,2,8,32], index: 1, kind: input, shape index: {}]
  %s2 = inlined_call_operand.hbm [shape: bf16[1,2,8,64], index: 2, kind: input, shape index: {}]
  %s3 = inlined_call_operand.vmem [shape: s32[1,2,1], index: 3, kind: input, shape index: {}]
  %s4 = inlined_call_operand.hbm [shape: bf16[32,32], index: 4, kind: input, shape index: {}]
  %s5 = inlined_call_operand.vmem [shape: f32[1,32], index: 5, kind: input, shape index: {}]
  %s6 = inlined_call_operand.hbm [shape: f32[1,2,64], index: 6, kind: output, shape index: {0}]
  %s7 = inlined_call_operand.hbm [shape: bf16[1,2,8], index: 7, kind: output, shape index: {1}]
  %8 = xla_tuple %s6, %s7
  %s9 = sld [smem:[#allocation0]]
  $region54: #{tpu_custom_call.1} parent=0
    _
  %s11 = ssub.s32 1, %s9
  %s12 = scalar_select 0, %s11, %s9
  $region1: #{tpu_custom_call.1} parent=0
    #allocation2 [shape = 'u8[4096]{0}', space=vmem, size = 0x1000, scoped, tag = 'input window, operand 1, single buffered']
    #allocation3 [shape = 's32[1]{0}', space=sflag, size = 0x4, scoped, tag = 'scoped memory for tpu_custom_call.1']
    #allocation4 [shape = 's32[1]{0}', space=sflag, size = 0x4, scoped, tag = 'scoped memory for tpu_custom_call.1']
    #allocation5 [shape = 'u8[4096]{0}', space=vmem, size = 0x1000, scoped, tag = 'input window, operand 2, single buffered']
    #allocation6 [shape = 's32[1]{0}', space=sflag, size = 0x4, scoped, tag = 'scoped memory for tpu_custom_call.1']
    #allocation7 [shape = 'u8[8192]{0}', space=vmem, size = 0x2000, scoped, tag = 'input window, operand 4, single buffered']
    #allocation8 [shape = 'u8[1024]{0}', space=vmem, size = 0x400, scoped, tag = 'output window, operand 0, single buffered']
    #allocation9 [shape = 'u8[512]{0}', space=vmem, size = 0x400, scoped, tag = 'output window, operand 1, single buffered']
    #allocation10 [shape = 's32[1]{0}', space=sflag, size = 0x4, scoped, tag = 'scoped memory for tpu_custom_call.1']
    %13 = vsyncpa [#allocation3], 0
    %14 = vsyncpa [#allocation6], 0
    %15 = vsyncpa [#allocation4], 0
    %16 = vsyncpa [#allocation10], 0
    // Predicated region
    $region2: #{tpu_custom_call.1} parent=1 // pred_check
      _
    $region3: #{tpu_custom_call.1} parent=1 // pred_check_branch
      %18 = sbr.rel (0) target = $region5
    $region4: #{tpu_custom_call.1} parent=1 // pred_region
      _
    $region5: #{tpu_custom_call.1} parent=1 // pred_fallthru
      _
    // Predicated region
    $region6: #{tpu_custom_call.1} parent=1 // pred_check
      _
    $region7: #{tpu_custom_call.1} parent=1 // pred_check_branch
      %20 = sbr.rel (0) target = $region9
    $region8: #{tpu_custom_call.1} parent=1 // pred_region
      %22 = vsyncadd [#allocation3], 0
      %s23 = sshll.u32 %s1, 4
      %s24 = int_to_ptr.hbm [resolvable:$true] %s23
      %s25 = sshll.u32 [#allocation2], 4
      %s26 = int_to_ptr.vmem [resolvable:$true] %s25
      %31 = dma.hbm_to_vmem [thread:$0]  %s24, 128, %s26, [#allocation3], 64, 64, 4
    $region9: #{tpu_custom_call.1} parent=1 // pred_fallthru
      _
    // Predicated region
    $region10: #{tpu_custom_call.1} parent=1 // pred_check
      _
    $region11: #{tpu_custom_call.1} parent=1 // pred_check_branch
      %33 = sbr.rel (0) target = $region13
    $region12: #{tpu_custom_call.1} parent=1 // pred_region
      %35 = vsyncadd [#allocation6], 0
      %s36 = sshll.u32 %s2, 4
      %s37 = int_to_ptr.hbm [resolvable:$true] %s36
      %s38 = sshll.u32 [#allocation5], 4
      %s39 = int_to_ptr.vmem [resolvable:$true] %s38
      %44 = dma.hbm_to_vmem [thread:$0]  %s37, 128, %s39, [#allocation6], 64, 64, 4
    $region13: #{tpu_custom_call.1} parent=1 // pred_fallthru
      _
    // Predicated region
    $region14: #{tpu_custom_call.1} parent=1 // pred_check
      _
    $region15: #{tpu_custom_call.1} parent=1 // pred_check_branch
      %46 = sbr.rel (0) target = $region17
    $region16: #{tpu_custom_call.1} parent=1 // pred_region
      _
    $region17: #{tpu_custom_call.1} parent=1 // pred_fallthru
      _
    // Predicated region
    $region18: #{tpu_custom_call.1} parent=1 // pred_check
      _
    $region19: #{tpu_custom_call.1} parent=1 // pred_check_branch
      %48 = sbr.rel (0) target = $region21
    $region20: #{tpu_custom_call.1} parent=1 // pred_region
      %50 = vsyncadd [#allocation6], 0
      %s51 = sshll.u32 %s4, 4
      %s52 = int_to_ptr.hbm [resolvable:$true] %s51
      %s53 = sshll.u32 [#allocation7], 4
      %s54 = int_to_ptr.vmem [resolvable:$true] %s53
      %59 = dma.hbm_to_vmem [thread:$0]  %s52, 256, %s54, [#allocation6], 64, 64, 4
    $region21: #{tpu_custom_call.1} parent=1 // pred_fallthru
      _
    // Predicated region
    $region22: #{tpu_custom_call.1} parent=1 // pred_check
      _
    $region23: #{tpu_custom_call.1} parent=1 // pred_check_branch
      %61 = sbr.rel (0) target = $region25
    $region24: #{tpu_custom_call.1} parent=1 // pred_region
      _
    $region25: #{tpu_custom_call.1} parent=1 // pred_fallthru
      _
    // Predicated region
    $region26: #{tpu_custom_call.1} parent=1 // pred_check
      _
    $region27: #{tpu_custom_call.1} parent=1 // pred_check_branch
      %63 = sbr.rel (0) target = $region29
    $region28: #{tpu_custom_call.1} parent=1 // pred_region
      %65 = dma.done [#allocation3], 128
    $region29: #{tpu_custom_call.1} parent=1 // pred_fallthru
      _
    // Predicated region
    $region30: #{tpu_custom_call.1} parent=1 // pred_check
      _
    $region31: #{tpu_custom_call.1} parent=1 // pred_check_branch
      %67 = sbr.rel (0) target = $region33
    $region32: #{tpu_custom_call.1} parent=1 // pred_region
      %69 = dma.done [#allocation6], 128
    $region33: #{tpu_custom_call.1} parent=1 // pred_fallthru
      _
    // Predicated region
    $region34: #{tpu_custom_call.1} parent=1 // pred_check
      _
    $region35: #{tpu_custom_call.1} parent=1 // pred_check_branch
      %71 = sbr.rel (0) target = $region37
    $region36: #{tpu_custom_call.1} parent=1 // pred_region
      %73 = dma.done [#allocation6], 256
    $region37: #{tpu_custom_call.1} parent=1 // pred_fallthru
      _
    %v75 = vld [vmem:[%s0] sm:$0x1]
    %v76 = vld [vmem:[#allocation7] sm:$0xf]
    %v77 = vld [vmem:[#allocation7 + $0x4] sm:$0xf]
    %v78 = vld [vmem:[#allocation7 + $0x8] sm:$0xf]
    %v79 = vld [vmem:[#allocation7 + $0xc] sm:$0xf]
    %v84 = vunpack.c.l.b16 %v76
    %v85 = vunpack.c.l.b16 %v77
    %v86 = vunpack.c.l.b16 %v78
    %v87 = vunpack.c.l.b16 %v79
    %v88 = vpack.c.b16 %v85, %v84
    %v89 = vpack.c.b16 %v87, %v86
    %vm92 = vcmask 261120
    %v94 = vsel %vm92, %v75, 0
    %96 = vmatpush.bf16.msra.mxu0 0
    %97 = vmatpush.bf16.msra.mxu0 0
    %98 = vmatpush.bf16.msra.mxu0 0
    %99 = vmatpush.bf16.msra.mxu0 0
    %100 = vmatpush.bf16.msra.mxu0 0
    %101 = vmatpush.bf16.msra.mxu0 0
    %102 = vmatpush.bf16.msra.mxu0 %v89
    %103 = vmatpush.bf16.msra.mxu0 %v88
    %104 = vmatmul.bf16.gmra.mxu0 %v94
    %v105 = vpop.f32.mrf.mxu0
    %v106 = vadd.f32 0.0, %v105
    %v107 = vpop.f32.mrf.mxu0
    %108 = vdwg.mxu0
    %v109 = vld [vmem:[#allocation2] sm:$0xf]
    %v110 = vld [vmem:[#allocation2 + $0x4] sm:$0xf]
    %v111 = vunpack.c.l.bf16 %v109
    %v112 = vunpack.c.l.bf16 %v110
    %v114 = vrot.slane %v106, 1
    %v115 = vperm.slane %v106, 0
    %v116 = vperm.slane %v114, 0
    %v119 = vadd.f32 %v115, %v111
    %v120 = vadd.f32 %v116, %v112
    %v121 = vtanh.pop %v119
    %v122 = vtanh.pop %v120
    %v123 = vld [vmem:[%s5] sm:$0x1]
    %v125 = vperm.slane %v123, 0
    %v127 = vmul.f32 %v121, %v125
    %v128 = vmul.f32 %v122, %v125
    %v129 = vsel %vm92, %v127, 0.0
    %130 = vadd.xlane.f32.xlu0 %v129
    %v131 = vpop.xlane.xlu0 %130
    %v132 = vsel %vm92, %v128, 0.0
    %133 = vadd.xlane.f32.xlu0 %v132
    %v134 = vpop.xlane.xlu0 %133
    %v135 = vlaneseq
    %v136 = vand.u32 %v135, 127
    %v137 = vld [vmem:[%s3] sm:$0x3]
    %138 = vset.pattern.permute.xlu0 0
    %139 = vperm.xlu0 %138, %v137
    %v140 = vpop.permute.xlu0 %139
    %vm141 = vcmp.lt.s32.totalorder %v136, %v140
    %v144 = vperm.slane %v131, %v136
    %v145 = vperm.slane %v134, %v136
    %vm146 = vcmask 1041409
    %v147 = vsel %vm146, %v145, %v144
    %v149 = vsel %vm141, %v147, -1e+30
    %vm150 = vcmask 58368
    %v151 = vsel %vm150, %v149, -inf
    %152 = vmax.xlane.f32.xlu0 %v151
    %v153 = vpop.xlane.xlu0 %152
    %v154 = vsub.f32 %v149, %v153
    %v155 = vmul.f32 %v154, 1.442695
    %v156 = vpow.pop %v155
    %v157 = vsel %vm150, %v156, 0.0
    %158 = vadd.xlane.f32.xlu0 %v157
    %v159 = vpop.xlane.xlu0 %158
    %v160 = vrcp.pop %v159
    %v161 = vmul.f32 %v156, %v160
    %v162 = vld [vmem:[#allocation5] sm:$0xf]
    %v163 = vld [vmem:[#allocation5 + $0x4] sm:$0xf]
    %v164 = vperm.slane %v161, 0
    %v165 = vlaneseq
    %v166 = vshrl.u32 %v165, 7
    %168 = vset.pattern.permute.xlu0 %v166
    %169 = vperm.xlu0 %168, %v164
    %v170 = vpop.permute.xlu0 %169
    %v171 = vperm.slane %v161, 1
    %v172 = vlaneseq
    %v173 = vshrl.u32 %v172, 7
    %175 = vset.pattern.permute.xlu0 %v173
    %176 = vperm.xlu0 %175, %v171
    %v177 = vpop.permute.xlu0 %176
    %v178 = vpack.c.bf16 %v170, %v170
    %v179 = vpack.c.bf16 %v177, %v177
    %v180 = vunpack.c.l.bf16 %v178
    %v181 = vunpack.c.l.bf16 %v179
    %v182 = vunpack.c.l.bf16 %v162
    %v183 = vunpack.c.l.bf16 %v163
    %v184 = vmul.f32 %v180, %v182
    %v185 = vmul.f32 %v181, %v183
    %v186 = vpack.c.bf16 %v184, %v184
    %v187 = vpack.c.bf16 %v185, %v185
    %v188 = vunpack.c.l.bf16 %v186
    %v189 = vunpack.c.l.bf16 %v187
    %vm190 = vcmask 523264
    %v191 = vsel %vm190, %v188, 0.0
    %v192 = vrot.slane %v191, 4
    %v193 = vadd.f32 %v191, %v192
    %v194 = vrot.slane %v193, 2
    %v195 = vadd.f32 %v193, %v194
    %v196 = vrot.slane %v195, 1
    %v197 = vadd.f32 %v195, %v196
    %v198 = vsel %vm190, %v189, 0.0
    %v199 = vrot.slane %v198, 4
    %v200 = vadd.f32 %v198, %v199
    %v201 = vrot.slane %v200, 2
    %v202 = vadd.f32 %v200, %v201
    %v203 = vrot.slane %v202, 1
    %v204 = vadd.f32 %v202, %v203
    %v207 = vsel %vm146, %v204, %v197
    %vm209 = vcmask 517120
    %210 = vst.msk [vmem:[#allocation8] sm:$0x3] %vm209, %v207
    %v211 = vpack.c.bf16 %v161, %v161
    %vm212 = vcmask 57344
    %213 = vst.msk [vmem:[#allocation9] sm:$0x1] %vm212, %v211
    // Predicated region
    $region38: #{tpu_custom_call.1} parent=1 // pred_check
      _
    $region39: #{tpu_custom_call.1} parent=1 // pred_check_branch
      %215 = sbr.rel (0) target = $region41
    $region40: #{tpu_custom_call.1} parent=1 // pred_region
      %217 = vsyncadd [#allocation4], 0
      %s219 = sshll.u32 [#allocation8], 4
      %s220 = int_to_ptr.vmem [resolvable:$true] %s219
      %s221 = sshll.u32 %s6, 4
      %s222 = int_to_ptr.hbm [resolvable:$true] %s221
      %224 = dma.vmem_to_hbm [thread:$0]  %s220, 32, %s222, [#allocation4]
    $region41: #{tpu_custom_call.1} parent=1 // pred_fallthru
      _
    // Predicated region
    $region42: #{tpu_custom_call.1} parent=1 // pred_check
      _
    $region43: #{tpu_custom_call.1} parent=1 // pred_check_branch
      %226 = sbr.rel (0) target = $region45
    $region44: #{tpu_custom_call.1} parent=1 // pred_region
      %228 = vsyncadd [#allocation10], 0
      %s230 = sshll.u32 [#allocation9], 4
      %s231 = int_to_ptr.vmem [resolvable:$true] %s230
      %s232 = sshll.u32 %s7, 4
      %s233 = int_to_ptr.hbm [resolvable:$true] %s232
      %235 = dma.vmem_to_hbm [thread:$0]  %s231, 16, %s233, [#allocation10]
    $region45: #{tpu_custom_call.1} parent=1 // pred_fallthru
      _
    // Predicated region
    $region46: #{tpu_custom_call.1} parent=1 // pred_check
      _
    $region47: #{tpu_custom_call.1} parent=1 // pred_check_branch
      %237 = sbr.rel (0) target = $region49
    $region48: #{tpu_custom_call.1} parent=1 // pred_region
      %239 = dma.done [#allocation4], 32
    $region49: #{tpu_custom_call.1} parent=1 // pred_fallthru
      _
    // Predicated region
    $region50: #{tpu_custom_call.1} parent=1 // pred_check
      _
    $region51: #{tpu_custom_call.1} parent=1 // pred_check_branch
      %241 = sbr.rel (0) target = $region53
    $region52: #{tpu_custom_call.1} parent=1 // pred_region
      %243 = dma.done [#allocation10], 16
    $region53: #{tpu_custom_call.1} parent=1 // pred_fallthru
      _
    %244 = vsyncpa [#allocation3], 1
    %245 = vsyncpa [#allocation6], 1
    %246 = vsyncpa [#allocation4], 1
    %247 = vsyncpa [#allocation10], 1

</llo_original>
